<compile_context>
chip_gen: v7x
topology: tpu7x:2x2x1
jax: 0.10.0
libtpu: 0.0.40
codegen_flags: <defaults>
</compile_context>

<pallas_src>
import functools

import jax
import jax.numpy as jnp
from jax.experimental import pallas as pl
from jax.experimental.pallas import tpu as pltpu


def _round_up(x, m):
    return ((x + m - 1) // m) * m


def _pad2d(x, rows, cols):
    r, c = x.shape
    if r == rows and c == cols:
        return x
    return jnp.pad(x, ((0, rows - r), (0, cols - c)))


def _adj_matmul_kernel(adj_ref, feat_ref, o_ref, acc_ref, *, c_dtype):
    """out_tile = sum_k adj_tile(k) @ feat_tile(k)  (feat already includes W)."""
    k = pl.program_id(1)

    @pl.when(k == 0)
    def _():
        acc_ref[...] = jnp.zeros_like(acc_ref)

    a = adj_ref[...].astype(c_dtype)          # cast in-kernel: adj streamed at HBM dtype
    acc_ref[...] += jnp.dot(a, feat_ref[...], preferred_element_type=jnp.float32)

    @pl.when(k == pl.num_programs(1) - 1)
    def _():
        o_ref[...] = acc_ref[...].astype(o_ref.dtype)


def _adj_matmul_fused_weight_kernel(adj_ref, feat_ref, w_ref, o_ref, acc_ref, *,
                                    c_dtype):
    """acc = sum_k adj_tile(k) @ X_tile(k);  out_tile = acc @ W at the last k."""
    k = pl.program_id(1)

    @pl.when(k == 0)
    def _():
        acc_ref[...] = jnp.zeros_like(acc_ref)

    a = adj_ref[...].astype(c_dtype)
    acc_ref[...] += jnp.dot(a, feat_ref[...], preferred_element_type=jnp.float32)

    @pl.when(k == pl.num_programs(1) - 1)
    def _():
        agg = acc_ref[...].astype(w_ref.dtype)
        o_ref[...] = jnp.dot(agg, w_ref[...],
                             preferred_element_type=jnp.float32
                             ).astype(o_ref.dtype)


@functools.partial(jax.jit, static_argnames=("tm", "tk", "compute_dtype"))
def hetero_gcn_layer(node_features, adj, weight, node_counts=None, *,
                     tm=512, tk=512, compute_dtype=jnp.bfloat16):
    """Pallas forward of HeteroGCNLayer: (adj @ node_features) @ weight."""
    del node_counts  # unused by the reference forward; kept for API parity.

    N, f_in = node_features.shape
    f_out = weight.shape[1]
    assert adj.shape == (N, N)
    out_dtype = jnp.dtype(node_features.dtype)
    c_dtype = jnp.dtype(compute_dtype)
    adj_dtype = jnp.dtype(adj.dtype)

    # ---- Sublane granularity (covers packed dtypes on any operand). ----
    sub = max(8, 32 // adj_dtype.itemsize, 32 // c_dtype.itemsize,
              32 // out_dtype.itemsize)

    # ---- Shape-dependent matmul ordering (minimize N^2-scale FLOPs). ----
    fuse_weight = f_out >= f_in
    if fuse_weight:
        feat = node_features.astype(c_dtype)        # kernel: (adj @ X) @ W
    else:
        # Precompute XW (cheap O(N*F_in*F_out)); kernel: adj @ XW.
        feat = jnp.dot(node_features.astype(c_dtype), weight.astype(c_dtype),
                       preferred_element_type=jnp.float32).astype(c_dtype)
    feat_w = feat.shape[1]
    f_feat = _round_up(feat_w, 128)                 # lane-dense feature width
    f_o = _round_up(f_out, 128)                     # lane-dense output width

    # ---- Tile sizes, clamped to the problem and to a VMEM budget. ----
    tm = _round_up(max(sub, min(tm, _round_up(N, sub))), sub)
    tk = _round_up(max(128, min(tk, _round_up(N, 128))), 128)

    def vmem_use(tm_, tk_):
        return (2 * tm_ * tk_ * adj_dtype.itemsize          # adj double buffer
                + 2 * tk_ * f_feat * c_dtype.itemsize        # feature double buffer
                + (2 * f_feat * f_o * c_dtype.itemsize if fuse_weight else 0)
                + 2 * tm_ * f_o * out_dtype.itemsize          # output double buffer
                + tm_ * f_feat * 4)                           # f32 accumulator

    budget = 40 * 1024 * 1024                       # leaves headroom on v7x (64 MiB)
    while vmem_use(tm, tk) > budget and (tk > 128 or tm > sub):
        if tk > 128:
            tk = max(128, _round_up(tk // 2, 128))
        else:
            tm = max(sub, _round_up(tm // 2, sub))

    n_rows = _round_up(N, tm)                       # padded output rows
    n_k = _round_up(N, tk)                          # padded contraction dim

    # ---- Zero-pad to tile / lane multiples (no-op when already aligned). ----
    adj_p = _pad2d(adj, n_rows, n_k)                # keep HBM dtype; cast in-kernel
    feat_p = _pad2d(feat, n_k, f_feat)

    in_specs = [
        pl.BlockSpec((tm, tk), lambda i, k: (i, k)),       # adj row/K tile
        pl.BlockSpec((tk, f_feat), lambda i, k: (k, 0)),   # feature K tile
    ]
    operands = [adj_p, feat_p]
    if fuse_weight:
        w_p = _pad2d(weight.astype(c_dtype), f_feat, f_o)
        in_specs.append(pl.BlockSpec((f_feat, f_o), lambda i, k: (0, 0)))
        operands.append(w_p)
        kernel = functools.partial(_adj_matmul_fused_weight_kernel, c_dtype=c_dtype)
    else:
        kernel = functools.partial(_adj_matmul_kernel, c_dtype=c_dtype)

    # ---- Cost / VMEM bookkeeping for the scheduler. ----
    flops = 2 * N * N * (f_in if fuse_weight else f_out) + 2 * N * f_in * f_out
    bytes_accessed = sum(int(op.size) * op.dtype.itemsize for op in operands)
    bytes_accessed += n_rows * f_o * out_dtype.itemsize
    vmem_limit = int(min(max(vmem_use(tm, tk) + (8 << 20), 32 << 20), 48 << 20))

    out_padded = pl.pallas_call(
        kernel,
        out_shape=jax.ShapeDtypeStruct((n_rows, f_o), out_dtype),
        grid_spec=pltpu.PrefetchScalarGridSpec(
            num_scalar_prefetch=0,
            grid=(n_rows // tm, n_k // tk),
            in_specs=in_specs,
            out_specs=pl.BlockSpec((tm, f_o), lambda i, k: (i, 0)),
            scratch_shapes=[pltpu.VMEM((tm, f_feat), jnp.float32)],
        ),
        compiler_params=pltpu.CompilerParams(
            dimension_semantics=("parallel", "arbitrary"),
            vmem_limit_bytes=vmem_limit,
        ),
        cost_estimate=pl.CostEstimate(
            flops=flops, transcendentals=0, bytes_accessed=bytes_accessed),
    )(*operands)

    return out_padded[:N, :f_out]


if __name__ == "__main__":
    key = jax.random.PRNGKey(0)

    def make_inputs(k, batch_size, n, f_in, f_out):
        N = batch_size * n
        k_w, k_x, k_a = jax.random.split(k, 3)
        weight = jax.random.normal(k_w, (f_in, f_out), dtype=jnp.float32)
        node_features = jax.random.normal(k_x, (N, f_in), dtype=jnp.float32)
        a = jax.random.uniform(k_a, (N, N), dtype=jnp.float32)
        adj = (a + a.T) * 0.5 + jnp.eye(N, dtype=jnp.float32)
        node_counts = jnp.full((batch_size,), n, dtype=jnp.int32)
        return node_features, adj, weight, node_counts

    def ref_f32(nf, adj, w):
        return (adj @ nf) @ w

    def ref_bf16(nf, adj, w, fuse_weight):
        bf = jnp.bfloat16
        if fuse_weight:
            agg = jnp.dot(adj.astype(bf), nf.astype(bf),
                          preferred_element_type=jnp.float32)
            return jnp.dot(agg.astype(bf), w.astype(bf),
                           preferred_element_type=jnp.float32)
        xw = jnp.dot(nf.astype(bf), w.astype(bf),
                     preferred_element_type=jnp.float32)
        return jnp.dot(adj.astype(bf), xw.astype(bf),
                       preferred_element_type=jnp.float32)

    def rel_err(a, b):
        return float(jnp.linalg.norm(a.astype(jnp.float32) - b) /
                     (jnp.linalg.norm(b) + 1e-12))

    k1, k2, k3 = jax.random.split(key, 3)

    # Case 1: fused-weight path (F_in <= F_out); batch=2 graphs of n=8 nodes.
    nf1, adj1, w1, nc1 = make_inputs(k1, batch_size=2, n=8, f_in=16, f_out=32)
    out1 = jax.block_until_ready(hetero_gcn_layer(nf1, adj1, w1, nc1))
    assert out1.shape == (16, 32)
    assert jnp.allclose(out1, ref_bf16(nf1, adj1, w1, True), atol=5e-2, rtol=5e-2)
    assert rel_err(out1, ref_f32(nf1, adj1, w1)) < 2e-2

    # Case 2: precomputed-XW path (F_out < F_in), N not a tile multiple.
    nf2, adj2, w2, nc2 = make_inputs(k2, batch_size=3, n=7, f_in=40, f_out=24)
    out2 = jax.block_until_ready(hetero_gcn_layer(nf2, adj2, w2, nc2))
    assert out2.shape == (21, 24)
    assert jnp.allclose(out2, ref_bf16(nf2, adj2, w2, False), atol=5e-2, rtol=5e-2)
    assert rel_err(out2, ref_f32(nf2, adj2, w2)) < 2e-2

    # Case 3: f32 compute path against the plain f32 reference.
    out3 = jax.block_until_ready(
        hetero_gcn_layer(nf1, adj1, w1, nc1, compute_dtype=jnp.float32))
    assert rel_err(out3, ref_f32(nf1, adj1, w1)) < 1e-3

    # Case 4: multi-tile grid (N=1024 -> 2x2 grid of 512x512 tiles), fused path.
    nf4, adj4, w4, nc4 = make_inputs(k3, batch_size=4, n=256, f_in=64, f_out=96)
    out4 = jax.block_until_ready(hetero_gcn_layer(nf4, adj4, w4, nc4))
    assert out4.shape == (1024, 96)
    assert rel_err(out4, ref_bf16(nf4, adj4, w4, True)) < 1e-2
    assert rel_err(out4, ref_f32(nf4, adj4, w4)) < 3e-2

    print("KERNEL_OK")
</pallas_src>

<mosaic_0001>
module attributes {stable_mosaic.version = 11 : i64} {
  func.func @_adj_matmul_fused_weight_kernel(%arg0: i32, %arg1: i32, %arg2: memref<16x128xf32, #tpu.memory_space<vmem>>, %arg3: memref<128x128xbf16, #tpu.memory_space<vmem>>, %arg4: memref<128x128xbf16, #tpu.memory_space<vmem>>, %arg5: memref<16x128xf32, #tpu.memory_space<vmem>>, %arg6: memref<16x128xf32, #tpu.memory_space<vmem>>) attributes {dimension_semantics = [#tpu.dimension_semantics<parallel>, #tpu.dimension_semantics<arbitrary>], iteration_bounds = array<i64: 1, 1>, scalar_prefetch = 0 : i64, scratch_operands = 1 : i64, tpu.core_type = #tpu.core_type<tc>, window_params = [{transform_indices = @transform_0, window_bounds = array<i64: 16, 128>}, {transform_indices = @transform_1, window_bounds = array<i64: 128, 128>}, {pipeline_mode = #tpu.pipeline_mode<synchronous>, transform_indices = @transform_2, window_bounds = array<i64: 128, 128>}, {transform_indices = @transform_3, window_bounds = array<i64: 16, 128>}]} {
    %c0_i32 = arith.constant 0 : i32
    %0 = arith.cmpi eq, %arg1, %c0_i32 : i32
    %1 = arith.extui %0 : i1 to i32
    %c0_i32_0 = arith.constant 0 : i32
    %2 = arith.cmpi ne, %1, %c0_i32_0 : i32
    scf.if %2 {
      %cst_10 = arith.constant 0.000000e+00 : f32
      %13 = vector.broadcast %cst_10 : f32 to vector<16x128xf32>
      %c0_11 = arith.constant 0 : index
      %c0_12 = arith.constant 0 : index
      %14 = vector.load %arg6[%c0_11, %c0_12] : memref<16x128xf32, #tpu.memory_space<vmem>>, vector<16x128xf32>
      tpu.vector_store %arg6[%c0_11, %c0_12], %13 {strides = array<i32>} : memref<16x128xf32, #tpu.memory_space<vmem>>, vector<16x128xf32>,
    } else {
    }
    %c0 = arith.constant 0 : index
    %c0_1 = arith.constant 0 : index
    %3 = vector.load %arg2[%c0, %c0_1] : memref<16x128xf32, #tpu.memory_space<vmem>>, vector<16x128xf32>
    %4 = arith.truncf %3 : vector<16x128xf32> to vector<16x128xbf16>
    %c0_2 = arith.constant 0 : index
    %c0_3 = arith.constant 0 : index
    %5 = vector.load %arg6[%c0_2, %c0_3] : memref<16x128xf32, #tpu.memory_space<vmem>>, vector<16x128xf32>
    %c0_4 = arith.constant 0 : index
    %c0_5 = arith.constant 0 : index
    %6 = vector.load %arg3[%c0_4, %c0_5] : memref<128x128xbf16, #tpu.memory_space<vmem>>, vector<128x128xbf16>
    %cst = arith.constant dense<0.000000e+00> : vector<16x128xf32>
    %7 = tpu.matmul %4, %6, %cst {dimension_numbers = #tpu.dot_dimension_numbers<[1], [0], [0], [1], [0, 0, 1, 1], [], []>} : vector<16x128xbf16>, vector<128x128xbf16>, vector<16x128xf32> -> vector<16x128xf32>
    %8 = arith.addf %5, %7 : vector<16x128xf32>
    %c0_6 = arith.constant 0 : index
    %c0_7 = arith.constant 0 : index
    %9 = vector.load %arg6[%c0_6, %c0_7] : memref<16x128xf32, #tpu.memory_space<vmem>>, vector<16x128xf32>
    tpu.vector_store %arg6[%c0_6, %c0_7], %8 {strides = array<i32>} : memref<16x128xf32, #tpu.memory_space<vmem>>, vector<16x128xf32>,
    %c0_i32_8 = arith.constant 0 : i32
    %10 = arith.cmpi eq, %arg1, %c0_i32_8 : i32
    %11 = arith.extui %10 : i1 to i32
    %c0_i32_9 = arith.constant 0 : i32
    %12 = arith.cmpi ne, %11, %c0_i32_9 : i32
    scf.if %12 {
      %c0_10 = arith.constant 0 : index
      %c0_11 = arith.constant 0 : index
      %13 = vector.load %arg6[%c0_10, %c0_11] : memref<16x128xf32, #tpu.memory_space<vmem>>, vector<16x128xf32>
      %14 = arith.truncf %13 : vector<16x128xf32> to vector<16x128xbf16>
      %c0_12 = arith.constant 0 : index
      %c0_13 = arith.constant 0 : index
      %15 = vector.load %arg4[%c0_12, %c0_13] : memref<128x128xbf16, #tpu.memory_space<vmem>>, vector<128x128xbf16>
      %cst_14 = arith.constant dense<0.000000e+00> : vector<16x128xf32>
      %16 = tpu.matmul %14, %15, %cst_14 {dimension_numbers = #tpu.dot_dimension_numbers<[1], [0], [0], [1], [0, 0, 1, 1], [], []>} : vector<16x128xbf16>, vector<128x128xbf16>, vector<16x128xf32> -> vector<16x128xf32>
      %c0_15 = arith.constant 0 : index
      %c0_16 = arith.constant 0 : index
      %17 = vector.load %arg5[%c0_15, %c0_16] : memref<16x128xf32, #tpu.memory_space<vmem>>, vector<16x128xf32>
      tpu.vector_store %arg5[%c0_15, %c0_16], %16 {strides = array<i32>} : memref<16x128xf32, #tpu.memory_space<vmem>>, vector<16x128xf32>,
    } else {
    }
    return
  }
  func.func @transform_0(%arg0: i32, %arg1: i32) -> (i32, i32) {
    %c0_i32 = arith.constant 0 : i32
    return %arg0, %arg1 : i32, i32
  }
  func.func @transform_1(%arg0: i32, %arg1: i32) -> (i32, i32) {
    %c0_i32 = arith.constant 0 : i32
    %c0_i32_0 = arith.constant 0 : i32
    return %arg1, %c0_i32 : i32, i32
  }
  func.func @transform_2(%arg0: i32, %arg1: i32) -> (i32, i32) {
    %c0_i32 = arith.constant 0 : i32
    %c0_i32_0 = arith.constant 0 : i32
    %c0_i32_1 = arith.constant 0 : i32
    return %c0_i32, %c0_i32_0 : i32, i32
  }
  func.func @transform_3(%arg0: i32, %arg1: i32) -> (i32, i32) {
    %c0_i32 = arith.constant 0 : i32
    %c0_i32_0 = arith.constant 0 : i32
    return %arg0, %c0_i32 : i32, i32
  }
}

</mosaic_0001>

<llo_original>
// kernel: hetero_gcn_layer.1
$region0: #{hetero_gcn_layer.1}
  #allocation0 [shape = 'u32[]', space=smem, size = 0x4, offset = 0x4, fixed_abs, tag = 'smem constant byte address 0x4 - core index']
  #allocation1 [shape = 'u32[144,128]{1,0:T(1,128)}', space=vmem, size = 0x12000, scoped, tag = 'internal scratch']
  #allocation2 [shape = 'f32[16,128]{1,0:T(8,128)}', space=vmem, size = 0x2000, scoped, tag = 'scratch operand']
  %s0 = inlined_call_operand.vmem [shape: f32[16,128], index: 0, kind: input, shape index: {}]
  %s1 = inlined_call_operand.vmem [shape: bf16[128,128], index: 1, kind: input, shape index: {}]
  %s2 = inlined_call_operand.vmem [shape: bf16[128,128], index: 2, kind: input, shape index: {}]
  %s3 = inlined_call_operand.hbm [shape: f32[16,128], index: 3, kind: output, shape index: {}]
  %s4 = sld [smem:[#allocation0]]
  $region30: #{hetero_gcn_layer.1} parent=0
    _
  %s6 = ssub.s32 1, %s4
  %s7 = scalar_select 0, %s6, %s4
  $region1: #{hetero_gcn_layer.1} parent=0
    #allocation3 [shape = 'u8[8192]{0}', space=vmem, size = 0x2000, scoped, tag = 'output window, operand 0, single buffered']
    #allocation4 [shape = 's32[1]{0}', space=sflag, size = 0x4, scoped, tag = 'scoped memory for hetero_gcn_layer.1']
    %8 = vsyncpa [#allocation4], 0
    // Predicated region
    $region2: #{hetero_gcn_layer.1} parent=1 // pred_check
      _
    $region3: #{hetero_gcn_layer.1} parent=1 // pred_check_branch
      %10 = sbr.rel (0) target = $region5
    $region4: #{hetero_gcn_layer.1} parent=1 // pred_region
      _
    $region5: #{hetero_gcn_layer.1} parent=1 // pred_fallthru
      _
    // Predicated region
    $region6: #{hetero_gcn_layer.1} parent=1 // pred_check
      _
    $region7: #{hetero_gcn_layer.1} parent=1 // pred_check_branch
      %12 = sbr.rel (0) target = $region9
    $region8: #{hetero_gcn_layer.1} parent=1 // pred_region
      _
    $region9: #{hetero_gcn_layer.1} parent=1 // pred_fallthru
      _
    // Predicated region
    $region10: #{hetero_gcn_layer.1} parent=1 // pred_check
      _
    $region11: #{hetero_gcn_layer.1} parent=1 // pred_check_branch
      %14 = sbr.rel (0) target = $region13
    $region12: #{hetero_gcn_layer.1} parent=1 // pred_region
      _
    $region13: #{hetero_gcn_layer.1} parent=1 // pred_fallthru
      _
    %p16 = scmp.eq.s32.totalorder 0, 0
    // Predicated region
    $region14: #{hetero_gcn_layer.1} parent=1 // pred_check
      %p17 = pneg %p16
    $region15: #{hetero_gcn_layer.1} parent=1 // pred_check_branch
      %19 = sbr.rel (%p17) target = $region17
    $region16: #{hetero_gcn_layer.1} parent=1 // pred_region
      %20 = vst [vmem:[#allocation2] sm:$0xff] 0.0
      %21 = vst [vmem:[#allocation2 + $0x8] sm:$0xff] 0.0
    $region17: #{hetero_gcn_layer.1} parent=1 // pred_fallthru
      _
    %v22 = vld [vmem:[%s0] sm:$0xff]
    %v23 = vld [vmem:[%s0 + $0x8] sm:$0xff]
    %v24 = vpack.c.bf16 %v23, %v22
    %v25 = vld [vmem:[#allocation2] sm:$0xff]
    %v26 = vld [vmem:[#allocation2 + $0x8] sm:$0xff]
    %v27 = vld [vmem:[%s1] sm:$0xf]
    %v28 = vld [vmem:[%s1 + $0x4] sm:$0xf]
    %v29 = vld [vmem:[%s1 + $0x8] sm:$0xf]
    %v30 = vld [vmem:[%s1 + $0xc] sm:$0xf]
    %v31 = vld [vmem:[%s1 + $0x10] sm:$0xf]
    %v32 = vld [vmem:[%s1 + $0x14] sm:$0xf]
    %v33 = vld [vmem:[%s1 + $0x18] sm:$0xf]
    %v34 = vld [vmem:[%s1 + $0x1c] sm:$0xf]
    %v35 = vld [vmem:[%s1 + $0x20] sm:$0xf]
    %v36 = vld [vmem:[%s1 + $0x24] sm:$0xf]
    %v37 = vld [vmem:[%s1 + $0x28] sm:$0xf]
    %v38 = vld [vmem:[%s1 + $0x2c] sm:$0xf]
    %v39 = vld [vmem:[%s1 + $0x30] sm:$0xf]
    %v40 = vld [vmem:[%s1 + $0x34] sm:$0xf]
    %v41 = vld [vmem:[%s1 + $0x38] sm:$0xf]
    %v42 = vld [vmem:[%s1 + $0x3c] sm:$0xf]
    %v59 = vunpack.c.l.b16 %v27
    %v60 = vunpack.c.l.b16 %v28
    %v61 = vunpack.c.l.b16 %v29
    %v62 = vunpack.c.l.b16 %v30
    %v63 = vunpack.c.l.b16 %v31
    %v64 = vunpack.c.l.b16 %v32
    %v65 = vunpack.c.l.b16 %v33
    %v66 = vunpack.c.l.b16 %v34
    %v67 = vunpack.c.l.b16 %v35
    %v68 = vunpack.c.l.b16 %v36
    %v69 = vunpack.c.l.b16 %v37
    %v70 = vunpack.c.l.b16 %v38
    %v71 = vunpack.c.l.b16 %v39
    %v72 = vunpack.c.l.b16 %v40
    %v73 = vunpack.c.l.b16 %v41
    %v74 = vunpack.c.l.b16 %v42
    %v75 = vpack.c.b16 %v60, %v59
    %v76 = vpack.c.b16 %v62, %v61
    %v77 = vpack.c.b16 %v64, %v63
    %v78 = vpack.c.b16 %v66, %v65
    %v79 = vpack.c.b16 %v68, %v67
    %v80 = vpack.c.b16 %v70, %v69
    %v81 = vpack.c.b16 %v72, %v71
    %v82 = vpack.c.b16 %v74, %v73
    %91 = vmatprep.subr.bf16.mxu0 0
    %92 = vmatpush1.bf16.msra.mxu0 %v75
    %93 = vmatprep.subr.bf16.mxu0 0
    %94 = vmatpush1.bf16.msra.mxu0 %v76
    %95 = vmatprep.subr.bf16.mxu0 0
    %96 = vmatpush1.bf16.msra.mxu0 %v77
    %97 = vmatprep.subr.bf16.mxu0 0
    %98 = vmatpush1.bf16.msra.mxu0 %v78
    %99 = vmatprep.subr.bf16.mxu0 0
    %100 = vmatpush1.bf16.msra.mxu0 %v79
    %101 = vmatprep.subr.bf16.mxu0 0
    %102 = vmatpush1.bf16.msra.mxu0 %v80
    %103 = vmatprep.subr.bf16.mxu0 0
    %104 = vmatpush1.bf16.msra.mxu0 %v81
    %105 = vmatprep.subr.bf16.mxu0 0
    %106 = vmatpush1.bf16.msra.mxu0 %v82
    %107 = vmatprep.subr.bf16.mxu0 0
    %108 = vmatpush1.bf16.msra.mxu0 0
    %109 = vmatprep.subr.bf16.mxu0 0
    %110 = vmatpush1.bf16.msra.mxu0 0
    %111 = vmatprep.subr.bf16.mxu0 0
    %112 = vmatpush1.bf16.msra.mxu0 0
    %113 = vmatprep.subr.bf16.mxu0 0
    %114 = vmatpush1.bf16.msra.mxu0 0
    %115 = vmatprep.subr.bf16.mxu0 0
    %116 = vmatpush1.bf16.msra.mxu0 0
    %117 = vmatprep.subr.bf16.mxu0 0
    %118 = vmatpush1.bf16.msra.mxu0 0
    %119 = vmatprep.subr.bf16.mxu0 0
    %120 = vmatpush1.bf16.msra.mxu0 0
    %121 = vmatprep.subr.bf16.mxu0 0
    %122 = vmatpush1.bf16.msra.mxu0 0
    %123 = vmatprep.mubr.bf16.mxu0 0
    %124 = vmatmul.mubr.bf16.gmra.mrb[0].mxu0 %v24
    %v125 = vpop.f32.mrb[0].mxu0
    %v126 = vadd.f32 0.0, %v125
    %v127 = vpop.f32.mrb[0].mxu0
    %v128 = vpop.f32.mrb[0].mxu0
    %v129 = vadd.f32 0.0, %v128
    %v130 = vpop.f32.mrb[0].mxu0
    %131 = vdwg.mxu0
    %v132 = vadd.f32 %v25, %v126
    %v133 = vadd.f32 %v26, %v129
    %134 = vst [vmem:[#allocation2] sm:$0xff] %v132
    %135 = vst [vmem:[#allocation2 + $0x8] sm:$0xff] %v133
    // Predicated region
    $region18: #{hetero_gcn_layer.1} parent=1 // pred_check
      %p136 = pneg %p16
    $region19: #{hetero_gcn_layer.1} parent=1 // pred_check_branch
      %138 = sbr.rel (%p136) target = $region21
    $region20: #{hetero_gcn_layer.1} parent=1 // pred_region
      %v139 = vld [vmem:[#allocation2] sm:$0xff]
      %v140 = vld [vmem:[#allocation2 + $0x8] sm:$0xff]
      %v141 = vpack.c.bf16 %v140, %v139
      %v142 = vld [vmem:[%s2] sm:$0xf]
      %v143 = vld [vmem:[%s2 + $0x4] sm:$0xf]
      %v144 = vld [vmem:[%s2 + $0x8] sm:$0xf]
      %v145 = vld [vmem:[%s2 + $0xc] sm:$0xf]
      %v146 = vld [vmem:[%s2 + $0x10] sm:$0xf]
      %v147 = vld [vmem:[%s2 + $0x14] sm:$0xf]
      %v148 = vld [vmem:[%s2 + $0x18] sm:$0xf]
      %v149 = vld [vmem:[%s2 + $0x1c] sm:$0xf]
      %v150 = vld [vmem:[%s2 + $0x20] sm:$0xf]
      %v151 = vld [vmem:[%s2 + $0x24] sm:$0xf]
      %v152 = vld [vmem:[%s2 + $0x28] sm:$0xf]
      %v153 = vld [vmem:[%s2 + $0x2c] sm:$0xf]
      %v154 = vld [vmem:[%s2 + $0x30] sm:$0xf]
      %v155 = vld [vmem:[%s2 + $0x34] sm:$0xf]
      %v156 = vld [vmem:[%s2 + $0x38] sm:$0xf]
      %v157 = vld [vmem:[%s2 + $0x3c] sm:$0xf]
      %v174 = vunpack.c.l.b16 %v142
      %v175 = vunpack.c.l.b16 %v143
      %v176 = vunpack.c.l.b16 %v144
      %v177 = vunpack.c.l.b16 %v145
      %v178 = vunpack.c.l.b16 %v146
      %v179 = vunpack.c.l.b16 %v147
      %v180 = vunpack.c.l.b16 %v148
      %v181 = vunpack.c.l.b16 %v149
      %v182 = vunpack.c.l.b16 %v150
      %v183 = vunpack.c.l.b16 %v151
      %v184 = vunpack.c.l.b16 %v152
      %v185 = vunpack.c.l.b16 %v153
      %v186 = vunpack.c.l.b16 %v154
      %v187 = vunpack.c.l.b16 %v155
      %v188 = vunpack.c.l.b16 %v156
      %v189 = vunpack.c.l.b16 %v157
      %v190 = vpack.c.b16 %v175, %v174
      %v191 = vpack.c.b16 %v177, %v176
      %v192 = vpack.c.b16 %v179, %v178
      %v193 = vpack.c.b16 %v181, %v180
      %v194 = vpack.c.b16 %v183, %v182
      %v195 = vpack.c.b16 %v185, %v184
      %v196 = vpack.c.b16 %v187, %v186
      %v197 = vpack.c.b16 %v189, %v188
      %206 = vmatprep.subr.bf16.mxu0 0
      %207 = vmatpush1.bf16.msra.mxu0 %v190
      %208 = vmatprep.subr.bf16.mxu0 0
      %209 = vmatpush1.bf16.msra.mxu0 %v191
      %210 = vmatprep.subr.bf16.mxu0 0
      %211 = vmatpush1.bf16.msra.mxu0 %v192
      %212 = vmatprep.subr.bf16.mxu0 0
      %213 = vmatpush1.bf16.msra.mxu0 %v193
      %214 = vmatprep.subr.bf16.mxu0 0
      %215 = vmatpush1.bf16.msra.mxu0 %v194
      %216 = vmatprep.subr.bf16.mxu0 0
      %217 = vmatpush1.bf16.msra.mxu0 %v195
      %218 = vmatprep.subr.bf16.mxu0 0
      %219 = vmatpush1.bf16.msra.mxu0 %v196
      %220 = vmatprep.subr.bf16.mxu0 0
      %221 = vmatpush1.bf16.msra.mxu0 %v197
      %222 = vmatprep.subr.bf16.mxu0 0
      %223 = vmatpush1.bf16.msra.mxu0 0
      %224 = vmatprep.subr.bf16.mxu0 0
      %225 = vmatpush1.bf16.msra.mxu0 0
      %226 = vmatprep.subr.bf16.mxu0 0
      %227 = vmatpush1.bf16.msra.mxu0 0
      %228 = vmatprep.subr.bf16.mxu0 0
      %229 = vmatpush1.bf16.msra.mxu0 0
      %230 = vmatprep.subr.bf16.mxu0 0
      %231 = vmatpush1.bf16.msra.mxu0 0
      %232 = vmatprep.subr.bf16.mxu0 0
      %233 = vmatpush1.bf16.msra.mxu0 0
      %234 = vmatprep.subr.bf16.mxu0 0
      %235 = vmatpush1.bf16.msra.mxu0 0
      %236 = vmatprep.subr.bf16.mxu0 0
      %237 = vmatpush1.bf16.msra.mxu0 0
      %238 = vmatprep.mubr.bf16.mxu0 0
      %239 = vmatmul.mubr.bf16.gmra.mrb[0].mxu0 %v141
      %v240 = vpop.f32.mrb[0].mxu0
      %v241 = vadd.f32 0.0, %v240
      %v242 = vpop.f32.mrb[0].mxu0
      %v243 = vpop.f32.mrb[0].mxu0
      %v244 = vadd.f32 0.0, %v243
      %v245 = vpop.f32.mrb[0].mxu0
      %246 = vdwg.mxu0
      %247 = vst [vmem:[#allocation3] sm:$0xff] %v241
      %248 = vst [vmem:[#allocation3 + $0x8] sm:$0xff] %v244
    $region21: #{hetero_gcn_layer.1} parent=1 // pred_fallthru
      _
    // Predicated region
    $region22: #{hetero_gcn_layer.1} parent=1 // pred_check
      _
    $region23: #{hetero_gcn_layer.1} parent=1 // pred_check_branch
      %250 = sbr.rel (0) target = $region25
    $region24: #{hetero_gcn_layer.1} parent=1 // pred_region
      %s252 = ssub.s32 256, 256
      %253 = vsyncadd [#allocation4], %s252
      %s254 = sshll.u32 [#allocation3], 4
      %s255 = int_to_ptr.vmem [resolvable:$true] %s254
      %260 = dma.vmem_to_hbm [thread:$0]  %s255, 256, %s3, [#allocation4], 128, 128, 8
    $region25: #{hetero_gcn_layer.1} parent=1 // pred_fallthru
      _
    // Predicated region
    $region26: #{hetero_gcn_layer.1} parent=1 // pred_check
      _
    $region27: #{hetero_gcn_layer.1} parent=1 // pred_check_branch
      %262 = sbr.rel (0) target = $region29
    $region28: #{hetero_gcn_layer.1} parent=1 // pred_region
      %263 = dma.done [#allocation4], 256
    $region29: #{hetero_gcn_layer.1} parent=1 // pred_fallthru
      _
    %264 = vsyncpa [#allocation4], 1

</llo_original>
